<compile_context>
chip_gen: v5e
topology: v5e:2x2
jax: 0.10.0
libtpu: 0.0.40
codegen_flags: <defaults>
</compile_context>

<pallas_src>
import functools

import jax
import jax.numpy as jnp
from jax.experimental import pallas as pl
from jax.experimental.pallas import tpu as pltpu

_MIN_TP = 512    # smallest pixel tile (multiple of 128)
_MAX_TP = 8192   # largest pixel tile; (G, TP) f32 temporaries stay well within VMEM


def _grid_sample_kernel(grid_ref, coord_ref, out_ref, *, G):
    # grid_ref : (G, G)   f32  grid parameter (rows = y/height, cols = x/width)
    # coord_ref: (2, TP)  f32  normalized sampling coords for this tile
    # out_ref  : (1, TP)  f32  sampled values
    n = coord_ref.shape[1]

    gx = coord_ref[0:1, :]  # (1, TP) normalized x in [-1, 1]
    gy = coord_ref[1:2, :]  # (1, TP) normalized y in [-1, 1]

    # align_corners=False unnormalization: ix = ((gx + 1) * size - 1) / 2
    ix = (gx + 1.0) * (G * 0.5) - 0.5
    iy = (gy + 1.0) * (G * 0.5) - 0.5

    # Cell-index iota along the G axis (exact small integers in f32), shared by
    # both directions.
    idx = jax.lax.broadcasted_iota(jnp.int32, (G, n), 0).astype(jnp.float32)

    # Separable bilinear "hat" weights: exactly 2 nonzeros per pixel column,
    # and 0 for any out-of-range corner -> padding_mode='zeros' for free.
    zero = jnp.float32(0.0)
    one = jnp.float32(1.0)
    wx = jnp.maximum(zero, one - jnp.abs(ix - idx))  # (G, TP)
    wy = jnp.maximum(zero, one - jnp.abs(iy - idx))  # (G, TP)

    # Stage 1 (MXU): x-direction gather + lerp for every grid row at once.
    inter = jnp.dot(grid_ref[...], wx, preferred_element_type=jnp.float32)  # (G, TP)
    # Stage 2 (VPU mul + XLU sublane reduce): y-direction lerp.
    out_ref[...] = jnp.sum(wy * inter, axis=0, keepdims=True)


def _round_up(v, m):
    return ((v + m - 1) // m) * m


def my_grid_forward(grid_param, x):
    """grid_param: (1,1,G,G) f32, x: (1,Ho,Wo,2) f32 -> (1,1,Ho,Wo) f32."""
    assert grid_param.shape[0] == 1 and grid_param.shape[1] == 1
    assert grid_param.shape[2] == grid_param.shape[3]
    assert x.shape[0] == 1 and x.shape[-1] == 2
    G = grid_param.shape[2]
    _, Ho, Wo, _ = x.shape
    P = Ho * Wo

    # Pick the biggest pixel tile that amortizes per-step overhead without
    # blowing up VMEM for the (G, TP) temporaries; tiny inputs stay small.
    tp_cap = _MAX_TP if G <= 64 else 1024
    TP = min(tp_cap, _round_up(P, _MIN_TP))
    P_pad = _round_up(P, TP)

    grid2d = grid_param.reshape(G, G).astype(jnp.float32)
    coords = x.reshape(P, 2).T.astype(jnp.float32)  # (2, P): row0 = x, row1 = y
    # Pad with -2.0: lands outside [-1,1] -> samples to 0, sliced off below.
    coords = jnp.pad(coords, ((0, 0), (0, P_pad - P)), constant_values=-2.0)

    out = pl.pallas_call(
        functools.partial(_grid_sample_kernel, G=G),
        out_shape=jax.ShapeDtypeStruct((1, P_pad), jnp.float32),
        grid_spec=pltpu.PrefetchScalarGridSpec(
            num_scalar_prefetch=0,
            grid=(P_pad // TP,),
            in_specs=[
                pl.BlockSpec((G, G), lambda i: (0, 0)),    # resident grid tile
                pl.BlockSpec((2, TP), lambda i: (0, i)),   # coords tile (lane-dense)
            ],
            out_specs=pl.BlockSpec((1, TP), lambda i: (0, i)),
        ),
        compiler_params=pltpu.CompilerParams(
            dimension_semantics=("parallel",)),
    )(grid2d, coords)

    return out[:, :P].reshape(1, 1, Ho, Wo)


def _reference(grid_param, x):
    """Independent gather-based grid_sample reference (bilinear/zeros/ac=False)."""
    G = grid_param.shape[2]
    g = grid_param[0, 0]
    gx = x[0, ..., 0]
    gy = x[0, ..., 1]
    ix = (gx + 1.0) * (G * 0.5) - 0.5
    iy = (gy + 1.0) * (G * 0.5) - 0.5
    x0 = jnp.floor(ix).astype(jnp.int32)
    y0 = jnp.floor(iy).astype(jnp.int32)
    x1 = x0 + 1
    y1 = y0 + 1
    wx1 = ix - x0
    wx0 = 1.0 - wx1
    wy1 = iy - y0
    wy0 = 1.0 - wy1

    def fetch(yy, xx):
        valid = (yy >= 0) & (yy < G) & (xx >= 0) & (xx < G)
        yc = jnp.clip(yy, 0, G - 1)
        xc = jnp.clip(xx, 0, G - 1)
        return jnp.where(valid, g[yc, xc], 0.0)

    out = (fetch(y0, x0) * wy0 * wx0 + fetch(y0, x1) * wy0 * wx1
           + fetch(y1, x0) * wy1 * wx0 + fetch(y1, x1) * wy1 * wx1)
    return out[None, None]


if __name__ == "__main__":
    key = jax.random.PRNGKey(0)
    k1, k2 = jax.random.split(key)

    grid_size = 16
    # Module __init__ uses torch.zeros for the parameter; use deterministic
    # random values here so the sampled output is non-trivial to verify.
    grid_param = jax.random.normal(k1, (1, 1, grid_size, grid_size), jnp.float32)
    # Sampling grid, including some out-of-range coords to exercise zeros padding.
    x = jax.random.uniform(k2, (1, 8, 8, 2), jnp.float32, minval=-1.1, maxval=1.1)

    out = my_grid_forward(grid_param, x)
    out = jax.block_until_ready(out)

    assert out.shape == (1, 1, 8, 8)
    ref = _reference(grid_param, x)
    assert jnp.allclose(out, ref, atol=1e-5, rtol=1e-5)
    print("KERNEL_OK")
</pallas_src>

<mosaic_0001>
module attributes {stable_mosaic.version = 11 : i64} {
  func.func @_grid_sample_kernel(%arg0: i32, %arg1: memref<16x16xf32, #tpu.memory_space<vmem>>, %arg2: memref<2x512xf32, #tpu.memory_space<vmem>>, %arg3: memref<1x512xf32, #tpu.memory_space<vmem>>) attributes {dimension_semantics = [#tpu.dimension_semantics<parallel>], iteration_bounds = array<i64: 1>, scalar_prefetch = 0 : i64, scratch_operands = 0 : i64, tpu.core_type = #tpu.core_type<tc>, window_params = [{pipeline_mode = #tpu.pipeline_mode<synchronous>, transform_indices = @transform_0, window_bounds = array<i64: 16, 16>}, {transform_indices = @transform_1, window_bounds = array<i64: 2, 512>}, {transform_indices = @transform_2, window_bounds = array<i64: 1, 512>}]} {
    %c0 = arith.constant 0 : index
    %c0_0 = arith.constant 0 : index
    %0 = vector.load %arg2[%c0, %c0_0] : memref<2x512xf32, #tpu.memory_space<vmem>>, vector<1x512xf32>
    %c1 = arith.constant 1 : index
    %c0_1 = arith.constant 0 : index
    %1 = vector.load %arg2[%c1, %c0_1] : memref<2x512xf32, #tpu.memory_space<vmem>>, vector<1x512xf32>
    %cst = arith.constant 1.000000e+00 : f32
    %2 = vector.broadcast %cst : f32 to vector<1x512xf32>
    %3 = arith.addf %0, %2 : vector<1x512xf32>
    %cst_2 = arith.constant 8.000000e+00 : f32
    %4 = vector.broadcast %cst_2 : f32 to vector<1x512xf32>
    %5 = arith.mulf %3, %4 : vector<1x512xf32>
    %cst_3 = arith.constant 5.000000e-01 : f32
    %6 = vector.broadcast %cst_3 : f32 to vector<1x512xf32>
    %7 = arith.subf %5, %6 : vector<1x512xf32>
    %cst_4 = arith.constant 1.000000e+00 : f32
    %8 = vector.broadcast %cst_4 : f32 to vector<1x512xf32>
    %9 = arith.addf %1, %8 : vector<1x512xf32>
    %cst_5 = arith.constant 8.000000e+00 : f32
    %10 = vector.broadcast %cst_5 : f32 to vector<1x512xf32>
    %11 = arith.mulf %9, %10 : vector<1x512xf32>
    %cst_6 = arith.constant 5.000000e-01 : f32
    %12 = vector.broadcast %cst_6 : f32 to vector<1x512xf32>
    %13 = arith.subf %11, %12 : vector<1x512xf32>
    %14 = tpu.iota {dimensions = array<i32: 0>} : vector<16x512xi32>
    %15 = arith.sitofp %14 : vector<16x512xi32> to vector<16x512xf32>
    %16 = vector.broadcast %7 : vector<1x512xf32> to vector<16x512xf32>
    %17 = arith.subf %16, %15 : vector<16x512xf32>
    %18 = math.absf %17 : vector<16x512xf32>
    %cst_7 = arith.constant 1.000000e+00 : f32
    %19 = vector.broadcast %cst_7 : f32 to vector<16x512xf32>
    %20 = arith.subf %19, %18 : vector<16x512xf32>
    %cst_8 = arith.constant 0.000000e+00 : f32
    %21 = vector.broadcast %cst_8 : f32 to vector<16x512xf32>
    %22 = arith.maximumf %21, %20 : vector<16x512xf32>
    %23 = vector.broadcast %13 : vector<1x512xf32> to vector<16x512xf32>
    %24 = arith.subf %23, %15 : vector<16x512xf32>
    %25 = math.absf %24 : vector<16x512xf32>
    %cst_9 = arith.constant 1.000000e+00 : f32
    %26 = vector.broadcast %cst_9 : f32 to vector<16x512xf32>
    %27 = arith.subf %26, %25 : vector<16x512xf32>
    %cst_10 = arith.constant 0.000000e+00 : f32
    %28 = vector.broadcast %cst_10 : f32 to vector<16x512xf32>
    %29 = arith.maximumf %28, %27 : vector<16x512xf32>
    %c0_11 = arith.constant 0 : index
    %c0_12 = arith.constant 0 : index
    %30 = vector.load %arg1[%c0_11, %c0_12] : memref<16x16xf32, #tpu.memory_space<vmem>>, vector<16x16xf32>
    %cst_13 = arith.constant dense<0.000000e+00> : vector<16x512xf32>
    %31 = tpu.matmul %30, %22, %cst_13 {dimension_numbers = #tpu.dot_dimension_numbers<[1], [0], [0], [1], [0, 0, 1, 1], [], []>} : vector<16x16xf32>, vector<16x512xf32>, vector<16x512xf32> -> vector<16x512xf32>
    %32 = arith.mulf %29, %31 : vector<16x512xf32>
    %cst_14 = arith.constant dense<0.000000e+00> : vector<512xf32>
    %33 = vector.multi_reduction <add>, %32, %cst_14 [0] : vector<16x512xf32> to vector<512xf32>
    %34 = vector.shape_cast %33 : vector<512xf32> to vector<1x512xf32>
    %c0_15 = arith.constant 0 : index
    %c0_16 = arith.constant 0 : index
    %35 = vector.load %arg3[%c0_15, %c0_16] : memref<1x512xf32, #tpu.memory_space<vmem>>, vector<1x512xf32>
    tpu.vector_store %arg3[%c0_15, %c0_16], %34 {strides = array<i32>} : memref<1x512xf32, #tpu.memory_space<vmem>>, vector<1x512xf32>,
    return
  }
  func.func @transform_0(%arg0: i32) -> (i32, i32) {
    %c0_i32 = arith.constant 0 : i32
    %c0_i32_0 = arith.constant 0 : i32
    %c0_i32_1 = arith.constant 0 : i32
    return %c0_i32, %c0_i32_0 : i32, i32
  }
  func.func @transform_1(%arg0: i32) -> (i32, i32) {
    %c0_i32 = arith.constant 0 : i32
    %c0_i32_0 = arith.constant 0 : i32
    return %c0_i32, %arg0 : i32, i32
  }
  func.func @transform_2(%arg0: i32) -> (i32, i32) {
    %c0_i32 = arith.constant 0 : i32
    %c0_i32_0 = arith.constant 0 : i32
    return %c0_i32, %arg0 : i32, i32
  }
}

</mosaic_0001>

<llo_original>
// kernel: tpu_custom_call.1
$region0: #{tpu_custom_call.1}
  #allocation0 [shape = 'u32[]', space=smem, size = 0x4, offset = 0x4, fixed_abs, tag = 'smem constant byte address 0x4 - core index']
  #allocation1 [shape = 'u32[72,128]{1,0:T(1,128)}', space=vmem, size = 0x9000, scoped, tag = 'internal scratch']
  %s0 = inlined_call_operand.hbm [shape: f32[16,16], index: 0, kind: input, shape index: {}]
  %s1 = inlined_call_operand.hbm [shape: f32[2,512], index: 1, kind: input, shape index: {}]
  %s2 = inlined_call_operand.hbm [shape: f32[1,512], index: 2, kind: output, shape index: {}]
  %s3 = sld [smem:[#allocation0]]
  $region26: #{tpu_custom_call.1} parent=0
    _
  %s5 = ssub.s32 1, %s3
  %s6 = scalar_select 0, %s5, %s3
  $region1: #{tpu_custom_call.1} parent=0
    #allocation2 [shape = 'u8[8192]{0}', space=vmem, size = 0x2000, scoped, tag = 'input window, operand 0, single buffered']
    #allocation3 [shape = 's32[1]{0}', space=sflag, size = 0x4, scoped, tag = 'scoped memory for tpu_custom_call.1']
    #allocation4 [shape = 's32[1]{0}', space=sflag, size = 0x4, scoped, tag = 'scoped memory for tpu_custom_call.1']
    #allocation5 [shape = 'u8[4096]{0}', space=vmem, size = 0x1000, scoped, tag = 'input window, operand 1, single buffered']
    #allocation6 [shape = 's32[1]{0}', space=sflag, size = 0x4, scoped, tag = 'scoped memory for tpu_custom_call.1']
    #allocation7 [shape = 'u8[2048]{0}', space=vmem, size = 0x800, scoped, tag = 'output window, operand 0, single buffered']
    %7 = vsyncpa [#allocation3], 0
    %8 = vsyncpa [#allocation6], 0
    %9 = vsyncpa [#allocation4], 0
    // Predicated region
    $region2: #{tpu_custom_call.1} parent=1 // pred_check
      _
    $region3: #{tpu_custom_call.1} parent=1 // pred_check_branch
      %11 = sbr.rel (0) target = $region5
    $region4: #{tpu_custom_call.1} parent=1 // pred_region
      %13 = vsyncadd [#allocation3], 0
      %s14 = sshll.u32 %s0, 4
      %s15 = int_to_ptr.hbm [resolvable:$true] %s14
      %s16 = sshll.u32 [#allocation2], 4
      %s17 = int_to_ptr.vmem [resolvable:$true] %s16
      %22 = dma.hbm_to_vmem [thread:$0]  %s15, 256, %s17, [#allocation3], 128, 128, 8
    $region5: #{tpu_custom_call.1} parent=1 // pred_fallthru
      _
    // Predicated region
    $region6: #{tpu_custom_call.1} parent=1 // pred_check
      _
    $region7: #{tpu_custom_call.1} parent=1 // pred_check_branch
      %24 = sbr.rel (0) target = $region9
    $region8: #{tpu_custom_call.1} parent=1 // pred_region
      %26 = vsyncadd [#allocation6], 0
      %s28 = sshll.u32 %s1, 4
      %s29 = int_to_ptr.hbm [resolvable:$true] %s28
      %s30 = sshll.u32 [#allocation5], 4
      %s31 = int_to_ptr.vmem [resolvable:$true] %s30
      %33 = dma.hbm_to_vmem [thread:$0]  %s29, 128, %s31, [#allocation6]
    $region9: #{tpu_custom_call.1} parent=1 // pred_fallthru
      _
    // Predicated region
    $region10: #{tpu_custom_call.1} parent=1 // pred_check
      _
    $region11: #{tpu_custom_call.1} parent=1 // pred_check_branch
      %35 = sbr.rel (0) target = $region13
    $region12: #{tpu_custom_call.1} parent=1 // pred_region
      %37 = dma.done [#allocation3], 256
    $region13: #{tpu_custom_call.1} parent=1 // pred_fallthru
      _
    // Predicated region
    $region14: #{tpu_custom_call.1} parent=1 // pred_check
      _
    $region15: #{tpu_custom_call.1} parent=1 // pred_check_branch
      %39 = sbr.rel (0) target = $region17
    $region16: #{tpu_custom_call.1} parent=1 // pred_region
      %41 = dma.done [#allocation6], 128
    $region17: #{tpu_custom_call.1} parent=1 // pred_fallthru
      _
    %v42 = vld [vmem:[#allocation5] ss:$2 sm:$0xf]
    %s43 = scalar_lea.vmem [#allocation5], 1
    %v44 = vld [vmem:[%s43] ss:$2 sm:$0xf]
    %v45 = vadd.f32 %v42, 1.0
    %v46 = vmul.f32 %v45, 8.0
    %v47 = vsub.f32 %v46, 0.5
    %v48 = vadd.f32 %v44, 1.0
    %v49 = vmul.f32 %v48, 8.0
    %v50 = vsub.f32 %v49, 0.5
    %v51 = vlaneseq
    %v52 = vshrl.u32 %v51, 7
    %v53 = vadd.s32 %v52, 8
    %v54 = vcvt.s32.f32 %v52
    %v55 = vcvt.s32.f32 %v53
    %v57 = vperm.slane %v47, 0
    %v58 = vperm.slane %v47, 1
    %v59 = vperm.slane %v47, 2
    %v60 = vperm.slane %v47, 3
    %v65 = vsub.f32 %v57, %v54
    %v66 = vsub.f32 %v58, %v54
    %v67 = vsub.f32 %v59, %v54
    %v68 = vsub.f32 %v60, %v54
    %v69 = vsub.f32 %v57, %v55
    %v70 = vsub.f32 %v58, %v55
    %v71 = vsub.f32 %v59, %v55
    %v72 = vsub.f32 %v60, %v55
    %v73 = vand.u32 2147483647, %v65
    %v74 = vand.u32 2147483647, %v66
    %v75 = vand.u32 2147483647, %v67
    %v76 = vand.u32 2147483647, %v68
    %v77 = vand.u32 2147483647, %v69
    %v78 = vand.u32 2147483647, %v70
    %v79 = vand.u32 2147483647, %v71
    %v80 = vand.u32 2147483647, %v72
    %v81 = vsub.f32 1.0, %v73
    %v82 = vsub.f32 1.0, %v74
    %v83 = vsub.f32 1.0, %v75
    %v84 = vsub.f32 1.0, %v76
    %v85 = vsub.f32 1.0, %v77
    %v86 = vsub.f32 1.0, %v78
    %v87 = vsub.f32 1.0, %v79
    %v88 = vsub.f32 1.0, %v80
    %v89 = vmax.f32 %v81, 0.0
    %v90 = vmax.f32 %v82, 0.0
    %v91 = vmax.f32 %v83, 0.0
    %v92 = vmax.f32 %v84, 0.0
    %v93 = vmax.f32 %v85, 0.0
    %v94 = vmax.f32 %v86, 0.0
    %v95 = vmax.f32 %v87, 0.0
    %v96 = vmax.f32 %v88, 0.0
    %v98 = vperm.slane %v50, 0
    %v99 = vperm.slane %v50, 1
    %v100 = vperm.slane %v50, 2
    %v101 = vperm.slane %v50, 3
    %v106 = vsub.f32 %v98, %v54
    %v107 = vsub.f32 %v99, %v54
    %v108 = vsub.f32 %v100, %v54
    %v109 = vsub.f32 %v101, %v54
    %v110 = vsub.f32 %v98, %v55
    %v111 = vsub.f32 %v99, %v55
    %v112 = vsub.f32 %v100, %v55
    %v113 = vsub.f32 %v101, %v55
    %v114 = vand.u32 2147483647, %v106
    %v115 = vand.u32 2147483647, %v107
    %v116 = vand.u32 2147483647, %v108
    %v117 = vand.u32 2147483647, %v109
    %v118 = vand.u32 2147483647, %v110
    %v119 = vand.u32 2147483647, %v111
    %v120 = vand.u32 2147483647, %v112
    %v121 = vand.u32 2147483647, %v113
    %v122 = vsub.f32 1.0, %v114
    %v123 = vsub.f32 1.0, %v115
    %v124 = vsub.f32 1.0, %v116
    %v125 = vsub.f32 1.0, %v117
    %v126 = vsub.f32 1.0, %v118
    %v127 = vsub.f32 1.0, %v119
    %v128 = vsub.f32 1.0, %v120
    %v129 = vsub.f32 1.0, %v121
    %v130 = vmax.f32 %v122, 0.0
    %v131 = vmax.f32 %v123, 0.0
    %v132 = vmax.f32 %v124, 0.0
    %v133 = vmax.f32 %v125, 0.0
    %v134 = vmax.f32 %v126, 0.0
    %v135 = vmax.f32 %v127, 0.0
    %v136 = vmax.f32 %v128, 0.0
    %v137 = vmax.f32 %v129, 0.0
    %v138 = vld [vmem:[#allocation2] sm:$0xff]
    %v139 = vld [vmem:[#allocation2 + $0x8] sm:$0xff]
    %vm140 = vcmask 130048
    %v142 = vsel %vm140, %v138, 0
    %v145 = vsel %vm140, %v139, 0
    %147 = vmatpush.msra.mxu0 0.0
    %148 = vmatpush.msra.mxu0 0.0
    %149 = vmatpush.msra.mxu0 0.0
    %150 = vmatpush.msra.mxu0 0.0
    %151 = vmatpush.msra.mxu0 0.0
    %152 = vmatpush.msra.mxu0 0.0
    %153 = vmatpush.msra.mxu0 0.0
    %154 = vmatpush.msra.mxu0 0.0
    %155 = vmatpush.msra.mxu0 0.0
    %156 = vmatpush.msra.mxu0 0.0
    %157 = vmatpush.msra.mxu0 0.0
    %158 = vmatpush.msra.mxu0 0.0
    %159 = vmatpush.msra.mxu0 0.0
    %160 = vmatpush.msra.mxu0 0.0
    %161 = vmatpush.msra.mxu0 %v93
    %162 = vmatpush.msra.mxu0 %v89
    %163 = vmatmul.f32.gmra.mxu0 %v142
    %v164 = vpop.f32.mrf.mxu0
    %v165 = vadd.f32 0.0, %v164
    %166 = vmatmul.f32.gmra.mxu0 %v145
    %v167 = vpop.f32.mrf.mxu0
    %v168 = vadd.f32 0.0, %v167
    %169 = vdwg.mxu0
    %170 = vmatpush.msra.mxu0 0.0
    %171 = vmatpush.msra.mxu0 0.0
    %172 = vmatpush.msra.mxu0 0.0
    %173 = vmatpush.msra.mxu0 0.0
    %174 = vmatpush.msra.mxu0 0.0
    %175 = vmatpush.msra.mxu0 0.0
    %176 = vmatpush.msra.mxu0 0.0
    %177 = vmatpush.msra.mxu0 0.0
    %178 = vmatpush.msra.mxu0 0.0
    %179 = vmatpush.msra.mxu0 0.0
    %180 = vmatpush.msra.mxu0 0.0
    %181 = vmatpush.msra.mxu0 0.0
    %182 = vmatpush.msra.mxu0 0.0
    %183 = vmatpush.msra.mxu0 0.0
    %184 = vmatpush.msra.mxu0 %v94
    %185 = vmatpush.msra.mxu0 %v90
    %186 = vmatmul.f32.gmra.mxu0 %v142
    %v187 = vpop.f32.mrf.mxu0
    %v188 = vadd.f32 0.0, %v187
    %189 = vmatmul.f32.gmra.mxu0 %v145
    %v190 = vpop.f32.mrf.mxu0
    %v191 = vadd.f32 0.0, %v190
    %192 = vdwg.mxu0
    %193 = vmatpush.msra.mxu0 0.0
    %194 = vmatpush.msra.mxu0 0.0
    %195 = vmatpush.msra.mxu0 0.0
    %196 = vmatpush.msra.mxu0 0.0
    %197 = vmatpush.msra.mxu0 0.0
    %198 = vmatpush.msra.mxu0 0.0
    %199 = vmatpush.msra.mxu0 0.0
    %200 = vmatpush.msra.mxu0 0.0
    %201 = vmatpush.msra.mxu0 0.0
    %202 = vmatpush.msra.mxu0 0.0
    %203 = vmatpush.msra.mxu0 0.0
    %204 = vmatpush.msra.mxu0 0.0
    %205 = vmatpush.msra.mxu0 0.0
    %206 = vmatpush.msra.mxu0 0.0
    %207 = vmatpush.msra.mxu0 %v95
    %208 = vmatpush.msra.mxu0 %v91
    %209 = vmatmul.f32.gmra.mxu0 %v142
    %v210 = vpop.f32.mrf.mxu0
    %v211 = vadd.f32 0.0, %v210
    %212 = vmatmul.f32.gmra.mxu0 %v145
    %v213 = vpop.f32.mrf.mxu0
    %v214 = vadd.f32 0.0, %v213
    %215 = vdwg.mxu0
    %216 = vmatpush.msra.mxu0 0.0
    %217 = vmatpush.msra.mxu0 0.0
    %218 = vmatpush.msra.mxu0 0.0
    %219 = vmatpush.msra.mxu0 0.0
    %220 = vmatpush.msra.mxu0 0.0
    %221 = vmatpush.msra.mxu0 0.0
    %222 = vmatpush.msra.mxu0 0.0
    %223 = vmatpush.msra.mxu0 0.0
    %224 = vmatpush.msra.mxu0 0.0
    %225 = vmatpush.msra.mxu0 0.0
    %226 = vmatpush.msra.mxu0 0.0
    %227 = vmatpush.msra.mxu0 0.0
    %228 = vmatpush.msra.mxu0 0.0
    %229 = vmatpush.msra.mxu0 0.0
    %230 = vmatpush.msra.mxu0 %v96
    %231 = vmatpush.msra.mxu0 %v92
    %232 = vmatmul.f32.gmra.mxu0 %v142
    %v233 = vpop.f32.mrf.mxu0
    %v234 = vadd.f32 0.0, %v233
    %235 = vmatmul.f32.gmra.mxu0 %v145
    %v236 = vpop.f32.mrf.mxu0
    %v237 = vadd.f32 0.0, %v236
    %238 = vdwg.mxu0
    %v239 = vmul.f32 %v130, %v165
    %v240 = vmul.f32 %v131, %v188
    %v241 = vmul.f32 %v132, %v211
    %v242 = vmul.f32 %v133, %v234
    %v243 = vmul.f32 %v134, %v168
    %v244 = vmul.f32 %v135, %v191
    %v245 = vmul.f32 %v136, %v214
    %v246 = vmul.f32 %v137, %v237
    %v247 = vadd.f32 %v239, %v243
    %v248 = vrot.slane %v247, 4
    %v249 = vadd.f32 %v247, %v248
    %v250 = vrot.slane %v249, 2
    %v251 = vadd.f32 %v249, %v250
    %v252 = vrot.slane %v251, 1
    %v253 = vadd.f32 %v251, %v252
    %v254 = vadd.f32 %v240, %v244
    %v255 = vrot.slane %v254, 4
    %v256 = vadd.f32 %v254, %v255
    %v257 = vrot.slane %v256, 2
    %v258 = vadd.f32 %v256, %v257
    %v259 = vrot.slane %v258, 1
    %v260 = vadd.f32 %v258, %v259
    %v261 = vadd.f32 %v241, %v245
    %v262 = vrot.slane %v261, 4
    %v263 = vadd.f32 %v261, %v262
    %v264 = vrot.slane %v263, 2
    %v265 = vadd.f32 %v263, %v264
    %v266 = vrot.slane %v265, 1
    %v267 = vadd.f32 %v265, %v266
    %v268 = vadd.f32 %v242, %v246
    %v269 = vrot.slane %v268, 4
    %v270 = vadd.f32 %v268, %v269
    %v271 = vrot.slane %v270, 2
    %v272 = vadd.f32 %v270, %v271
    %v273 = vrot.slane %v272, 1
    %v274 = vadd.f32 %v272, %v273
    %v279 = vrot.slane %v260, 7
    %v280 = vrot.slane %v267, 6
    %v281 = vrot.slane %v274, 5
    %vm282 = vcmask 1040384
    %v283 = vsel %vm282, %v253, %v279
    %vm284 = vcmask 1042434
    %v285 = vsel %vm284, %v280, %v281
    %vm286 = vcmask 1041408
    %v287 = vsel %vm286, %v283, %v285
    %v289 = vlaneseq
    %vm290 = vcmp.ge.s32.totalorder %v289, 0
    %vm291 = vcmp.lt.s32.totalorder %v289, 512
    %vm292 = vmand %vm290, %vm291
    %293 = vst.msk [vmem:[#allocation7] sm:$0xf] %vm292, %v287
    // Predicated region
    $region18: #{tpu_custom_call.1} parent=1 // pred_check
      _
    $region19: #{tpu_custom_call.1} parent=1 // pred_check_branch
      %295 = sbr.rel (0) target = $region21
    $region20: #{tpu_custom_call.1} parent=1 // pred_region
      %297 = vsyncadd [#allocation4], 0
      %s299 = sshll.u32 [#allocation7], 4
      %s300 = int_to_ptr.vmem [resolvable:$true] %s299
      %s301 = sshll.u32 %s2, 4
      %s302 = int_to_ptr.hbm [resolvable:$true] %s301
      %304 = dma.vmem_to_hbm [thread:$0]  %s300, 64, %s302, [#allocation4]
    $region21: #{tpu_custom_call.1} parent=1 // pred_fallthru
      _
    // Predicated region
    $region22: #{tpu_custom_call.1} parent=1 // pred_check
      _
    $region23: #{tpu_custom_call.1} parent=1 // pred_check_branch
      %306 = sbr.rel (0) target = $region25
    $region24: #{tpu_custom_call.1} parent=1 // pred_region
      %308 = dma.done [#allocation4], 64
    $region25: #{tpu_custom_call.1} parent=1 // pred_fallthru
      _
    %309 = vsyncpa [#allocation3], 1
    %310 = vsyncpa [#allocation6], 1
    %311 = vsyncpa [#allocation4], 1

</llo_original>
